<compile_context>
chip_gen: v5e
topology: v5e:2x2
jax: 0.10.0
libtpu: 0.0.40
codegen_flags: <defaults>
</compile_context>

<pallas_src>
import math

import numpy as np
import jax
import jax.numpy as jnp
from jax.experimental import pallas as pl
from jax.experimental.pallas import tpu as pltpu

# ---- small, TPU-friendly synthetic sizes ----
B = 8            # batch
OBS = 32         # observation dim
ACT = 8          # action dim
FEAT = 128       # encoder.get_feature_size()
EMBED = 64       # embed_size
N_GREEDY = 32    # n_greedy_quantiles (eval-mode tau count)
TILE_B = 8       # batch tile per grid step (== B for this synthetic test)

# ---- eval-mode prior table: input-independent, constant-folded at trace time ----
# taus = linspace(0, 1, T) (endpoints included, per d3rlpy); prior[t, e] = cos(pi*(e+1)*tau_t)
# Stored transposed (EMBED, T) so the in-kernel fc matmul needs no XLU transpose.
_TAUS = np.linspace(0.0, 1.0, N_GREEDY, dtype=np.float32)                  # (T,)
_STEPS = np.arange(1, EMBED + 1, dtype=np.float32)                         # (E,)
_PRIOR_T = np.cos(math.pi * _STEPS[:, None] * _TAUS[None, :]).astype(np.float32)  # (E, T)


def _iqn_forward_kernel(xa_ref, wenc_ref, benc_ref, prior_t_ref,
                        wemb_t_ref, bemb_col_ref, wfc_ref, bfc_ref, out_ref):
    # ---- encoder: h = relu(concat(x, a) @ W_enc + b_enc)  (single fused matmul) ----
    h = jnp.dot(xa_ref[...], wenc_ref[...], preferred_element_type=jnp.float32)
    h = jnp.maximum(h + benc_ref[...], 0.0)                            # (TILE_B, FEAT)

    # ---- phi^T = relu(W_emb^T @ prior^T + b_emb)  -> (FEAT, T), lane axis = T ----
    phi_t = jnp.dot(wemb_t_ref[...], prior_t_ref[...],
                    preferred_element_type=jnp.float32)
    phi_t = jnp.maximum(phi_t + bemb_col_ref[...], 0.0)                # (FEAT, T)

    # ---- fc(h[:,None,:] * phi): q[b,t] = sum_f h[b,f] * w_fc[f] * phi[t,f] ----
    hw = h * wfc_ref[...]                                              # (TILE_B, FEAT)
    q = jnp.dot(hw, phi_t, preferred_element_type=jnp.float32)         # (TILE_B, T)

    # ---- forward output: mean over quantiles; fc bias added after (mean(q+c)==mean(q)+c) ----
    out_ref[...] = jnp.mean(q, axis=1, keepdims=True) + bfc_ref[0, 0]  # (TILE_B, 1)


@jax.jit
def iqn_forward(x, action, params):
    w_enc, b_enc, wemb, bemb, wfc, bfc = params
    batch = x.shape[0]

    xa = jnp.concatenate([x, action], axis=1)          # (B, OBS+ACT) — fused encoder input
    wemb_t = wemb.T                                    # (FEAT, EMBED)
    bemb_col = bemb.reshape(FEAT, 1)                   # (FEAT, 1)
    prior_t = jnp.asarray(_PRIOR_T)                    # (EMBED, T) trace-time constant

    const_map = lambda i: (0, 0)                       # weights stay VMEM-resident
    grid_spec = pltpu.PrefetchScalarGridSpec(
        num_scalar_prefetch=0,
        grid=(batch // TILE_B,),
        in_specs=[
            pl.BlockSpec((TILE_B, OBS + ACT), lambda i: (i, 0)),       # xa
            pl.BlockSpec((OBS + ACT, FEAT), const_map),                # W_enc
            pl.BlockSpec((1, FEAT), const_map),                        # b_enc
            pl.BlockSpec((EMBED, N_GREEDY), const_map),                # prior^T (constant)
            pl.BlockSpec((FEAT, EMBED), const_map),                    # W_emb^T
            pl.BlockSpec((FEAT, 1), const_map),                        # b_emb (column)
            pl.BlockSpec((1, FEAT), const_map),                        # w_fc (row)
            pl.BlockSpec(memory_space=pltpu.MemorySpace.SMEM),         # b_fc scalar in SMEM
        ],
        out_specs=pl.BlockSpec((TILE_B, 1), lambda i: (i, 0)),
    )
    return pl.pallas_call(
        _iqn_forward_kernel,
        out_shape=jax.ShapeDtypeStruct((batch, 1), jnp.float32),
        grid_spec=grid_spec,
        compiler_params=pltpu.CompilerParams(dimension_semantics=("parallel",)),
    )(xa, w_enc, b_enc, prior_t, wemb_t, bemb_col, wfc, bfc)


def reference_forward(x, action, params):
    """Pure-JAX reference mirroring the PyTorch forward (eval mode) literally."""
    w_enc, b_enc, wemb, bemb, wfc, bfc = params
    h = jax.nn.relu(jnp.concatenate([x, action], axis=1) @ w_enc + b_enc)        # (B, FEAT)
    taus = jnp.tile(jnp.linspace(0.0, 1.0, N_GREEDY)[None, :], (x.shape[0], 1))  # (B, T)
    steps = jnp.arange(EMBED, dtype=jnp.float32) + 1.0
    prior = jnp.cos(math.pi * steps[None, None, :] * taus[:, :, None])           # (B, T, E)
    phi = jax.nn.relu(jnp.einsum('bte,ef->btf', prior, wemb) + bemb)             # (B, T, FEAT)
    prod = h[:, None, :] * phi                                                   # (B, T, FEAT)
    q = jnp.einsum('btf,f->bt', prod, wfc[0]) + bfc[0, 0]                        # (B, T)
    return q.mean(axis=1, keepdims=True)


if __name__ == "__main__":
    key = jax.random.PRNGKey(0)
    keys = jax.random.split(key, 8)
    x = jax.random.normal(keys[0], (B, OBS), jnp.float32)
    action = jax.random.normal(keys[1], (B, ACT), jnp.float32)

    scale = 0.05
    w_enc = scale * jax.random.normal(keys[2], (OBS + ACT, FEAT), jnp.float32)   # encoder weight
    b_enc = scale * jax.random.normal(keys[3], (1, FEAT), jnp.float32)           # encoder bias
    wemb = scale * jax.random.normal(keys[4], (EMBED, FEAT), jnp.float32)        # nn.Linear(embed, feat)
    bemb = scale * jax.random.normal(keys[5], (1, FEAT), jnp.float32)
    wfc = scale * jax.random.normal(keys[6], (1, FEAT), jnp.float32)             # nn.Linear(feat, 1) weight (row)
    bfc = scale * jax.random.normal(keys[7], (1, 1), jnp.float32)                # nn.Linear(feat, 1) bias
    params = (w_enc, b_enc, wemb, bemb, wfc, bfc)

    out = iqn_forward(x, action, params)
    jax.block_until_ready(out)

    ref = reference_forward(x, action, params)
    assert out.shape == (B, 1), out.shape
    assert jnp.allclose(out, ref, atol=1e-4, rtol=1e-4), (out, ref)
    print("KERNEL_OK")
</pallas_src>

<mosaic_0001>
module attributes {stable_mosaic.version = 11 : i64} {
  func.func @_iqn_forward_kernel(%arg0: i32, %arg1: memref<8x40xf32, #tpu.memory_space<vmem>>, %arg2: memref<40x128xf32, #tpu.memory_space<vmem>>, %arg3: memref<1x128xf32, #tpu.memory_space<vmem>>, %arg4: memref<64x32xf32, #tpu.memory_space<vmem>>, %arg5: memref<128x64xf32, #tpu.memory_space<vmem>>, %arg6: memref<128x1xf32, #tpu.memory_space<vmem>>, %arg7: memref<1x128xf32, #tpu.memory_space<vmem>>, %arg8: memref<1x1xf32, #tpu.memory_space<smem>>, %arg9: memref<8x1xf32, #tpu.memory_space<vmem>>) attributes {dimension_semantics = [#tpu.dimension_semantics<parallel>], iteration_bounds = array<i64: 1>, scalar_prefetch = 0 : i64, scratch_operands = 0 : i64, tpu.core_type = #tpu.core_type<tc>, window_params = [{transform_indices = @transform_0, window_bounds = array<i64: 8, 40>}, {pipeline_mode = #tpu.pipeline_mode<synchronous>, transform_indices = @transform_1, window_bounds = array<i64: 40, 128>}, {pipeline_mode = #tpu.pipeline_mode<synchronous>, transform_indices = @transform_2, window_bounds = array<i64: 1, 128>}, {pipeline_mode = #tpu.pipeline_mode<synchronous>, transform_indices = @transform_3, window_bounds = array<i64: 64, 32>}, {pipeline_mode = #tpu.pipeline_mode<synchronous>, transform_indices = @transform_4, window_bounds = array<i64: 128, 64>}, {pipeline_mode = #tpu.pipeline_mode<synchronous>, transform_indices = @transform_5, window_bounds = array<i64: 128, 1>}, {pipeline_mode = #tpu.pipeline_mode<synchronous>, transform_indices = @transform_6, window_bounds = array<i64: 1, 128>}, {transform_indices = @transform_7, window_bounds = array<i64: 1, 1>}, {transform_indices = @transform_8, window_bounds = array<i64: 8, 1>}]} {
    %c0 = arith.constant 0 : index
    %c0_0 = arith.constant 0 : index
    %0 = vector.load %arg1[%c0, %c0_0] : memref<8x40xf32, #tpu.memory_space<vmem>>, vector<8x40xf32>
    %c0_1 = arith.constant 0 : index
    %c0_2 = arith.constant 0 : index
    %1 = vector.load %arg2[%c0_1, %c0_2] : memref<40x128xf32, #tpu.memory_space<vmem>>, vector<40x128xf32>
    %cst = arith.constant dense<0.000000e+00> : vector<8x128xf32>
    %2 = tpu.matmul %0, %1, %cst {dimension_numbers = #tpu.dot_dimension_numbers<[1], [0], [0], [1], [0, 0, 1, 1], [], []>} : vector<8x40xf32>, vector<40x128xf32>, vector<8x128xf32> -> vector<8x128xf32>
    %c0_3 = arith.constant 0 : index
    %c0_4 = arith.constant 0 : index
    %3 = vector.load %arg3[%c0_3, %c0_4] : memref<1x128xf32, #tpu.memory_space<vmem>>, vector<1x128xf32>
    %4 = vector.broadcast %3 : vector<1x128xf32> to vector<8x128xf32>
    %5 = arith.addf %2, %4 : vector<8x128xf32>
    %cst_5 = arith.constant 0.000000e+00 : f32
    %6 = vector.broadcast %cst_5 : f32 to vector<8x128xf32>
    %7 = arith.maximumf %5, %6 : vector<8x128xf32>
    %c0_6 = arith.constant 0 : index
    %c0_7 = arith.constant 0 : index
    %8 = vector.load %arg5[%c0_6, %c0_7] : memref<128x64xf32, #tpu.memory_space<vmem>>, vector<128x64xf32>
    %c0_8 = arith.constant 0 : index
    %c0_9 = arith.constant 0 : index
    %9 = vector.load %arg4[%c0_8, %c0_9] : memref<64x32xf32, #tpu.memory_space<vmem>>, vector<64x32xf32>
    %cst_10 = arith.constant dense<0.000000e+00> : vector<128x32xf32>
    %10 = tpu.matmul %8, %9, %cst_10 {dimension_numbers = #tpu.dot_dimension_numbers<[1], [0], [0], [1], [0, 0, 1, 1], [], []>} : vector<128x64xf32>, vector<64x32xf32>, vector<128x32xf32> -> vector<128x32xf32>
    %c0_11 = arith.constant 0 : index
    %c0_12 = arith.constant 0 : index
    %11 = vector.load %arg6[%c0_11, %c0_12] : memref<128x1xf32, #tpu.memory_space<vmem>>, vector<128x1xf32>
    %12 = vector.broadcast %11 : vector<128x1xf32> to vector<128x32xf32>
    %13 = arith.addf %10, %12 : vector<128x32xf32>
    %cst_13 = arith.constant 0.000000e+00 : f32
    %14 = vector.broadcast %cst_13 : f32 to vector<128x32xf32>
    %15 = arith.maximumf %13, %14 : vector<128x32xf32>
    %c0_14 = arith.constant 0 : index
    %c0_15 = arith.constant 0 : index
    %16 = vector.load %arg7[%c0_14, %c0_15] : memref<1x128xf32, #tpu.memory_space<vmem>>, vector<1x128xf32>
    %17 = vector.broadcast %16 : vector<1x128xf32> to vector<8x128xf32>
    %18 = arith.mulf %7, %17 : vector<8x128xf32>
    %cst_16 = arith.constant dense<0.000000e+00> : vector<8x32xf32>
    %19 = tpu.matmul %18, %15, %cst_16 {dimension_numbers = #tpu.dot_dimension_numbers<[1], [0], [0], [1], [0, 0, 1, 1], [], []>} : vector<8x128xf32>, vector<128x32xf32>, vector<8x32xf32> -> vector<8x32xf32>
    %cst_17 = arith.constant dense<0.000000e+00> : vector<8xf32>
    %20 = vector.multi_reduction <add>, %19, %cst_17 [1] : vector<8x32xf32> to vector<8xf32>
    %21 = vector.shape_cast %20 : vector<8xf32> to vector<8x1xf32>
    %cst_18 = arith.constant 3.200000e+01 : f32
    %22 = vector.broadcast %cst_18 : f32 to vector<8x1xf32>
    %23 = arith.divf %21, %22 : vector<8x1xf32>
    %c0_19 = arith.constant 0 : index
    %c0_20 = arith.constant 0 : index
    %24 = memref.load %arg8[%c0_19, %c0_20] : memref<1x1xf32, #tpu.memory_space<smem>>
    %25 = vector.broadcast %24 : f32 to vector<8x1xf32>
    %26 = arith.addf %23, %25 : vector<8x1xf32>
    %c0_21 = arith.constant 0 : index
    %c0_22 = arith.constant 0 : index
    %27 = vector.load %arg9[%c0_21, %c0_22] : memref<8x1xf32, #tpu.memory_space<vmem>>, vector<8x1xf32>
    tpu.vector_store %arg9[%c0_21, %c0_22], %26 {strides = array<i32>} : memref<8x1xf32, #tpu.memory_space<vmem>>, vector<8x1xf32>,
    return
  }
  func.func @transform_0(%arg0: i32) -> (i32, i32) {
    %c0_i32 = arith.constant 0 : i32
    %c0_i32_0 = arith.constant 0 : i32
    return %arg0, %c0_i32 : i32, i32
  }
  func.func @transform_1(%arg0: i32) -> (i32, i32) {
    %c0_i32 = arith.constant 0 : i32
    %c0_i32_0 = arith.constant 0 : i32
    %c0_i32_1 = arith.constant 0 : i32
    return %c0_i32, %c0_i32_0 : i32, i32
  }
  func.func @transform_2(%arg0: i32) -> (i32, i32) {
    %c0_i32 = arith.constant 0 : i32
    %c0_i32_0 = arith.constant 0 : i32
    %c0_i32_1 = arith.constant 0 : i32
    return %c0_i32, %c0_i32_0 : i32, i32
  }
  func.func @transform_3(%arg0: i32) -> (i32, i32) {
    %c0_i32 = arith.constant 0 : i32
    %c0_i32_0 = arith.constant 0 : i32
    %c0_i32_1 = arith.constant 0 : i32
    return %c0_i32, %c0_i32_0 : i32, i32
  }
  func.func @transform_4(%arg0: i32) -> (i32, i32) {
    %c0_i32 = arith.constant 0 : i32
    %c0_i32_0 = arith.constant 0 : i32
    %c0_i32_1 = arith.constant 0 : i32
    return %c0_i32, %c0_i32_0 : i32, i32
  }
  func.func @transform_5(%arg0: i32) -> (i32, i32) {
    %c0_i32 = arith.constant 0 : i32
    %c0_i32_0 = arith.constant 0 : i32
    %c0_i32_1 = arith.constant 0 : i32
    return %c0_i32, %c0_i32_0 : i32, i32
  }
  func.func @transform_6(%arg0: i32) -> (i32, i32) {
    %c0_i32 = arith.constant 0 : i32
    %c0_i32_0 = arith.constant 0 : i32
    %c0_i32_1 = arith.constant 0 : i32
    return %c0_i32, %c0_i32_0 : i32, i32
  }
  func.func @transform_7(%arg0: i32) -> (i32, i32) {
    %c0_i32 = arith.constant 0 : i32
    %c0_i32_0 = arith.constant 0 : i32
    %c0_i32_1 = arith.constant 0 : i32
    return %c0_i32, %c0_i32_0 : i32, i32
  }
  func.func @transform_8(%arg0: i32) -> (i32, i32) {
    %c0_i32 = arith.constant 0 : i32
    %c0_i32_0 = arith.constant 0 : i32
    return %arg0, %c0_i32 : i32, i32
  }
}

</mosaic_0001>

<llo_original>
// kernel: iqn_forward.1
$region0: #{iqn_forward.1}
  #allocation0 [shape = 'u32[]', space=smem, size = 0x4, offset = 0x4, fixed_abs, tag = 'smem constant byte address 0x4 - core index']
  #allocation1 [shape = 'u32[72,128]{1,0:T(1,128)}', space=vmem, size = 0x9000, scoped, tag = 'internal scratch']
  #allocation2 [shape = 'f32[1,1]{1,0:T(1,128)S(6)}', space=smem, size = 0x200, scoped, tag = 'scoped memory for iqn_forward.1']
  %s0 = inlined_call_operand.vmem [shape: f32[8,40], index: 0, kind: input, shape index: {}]
  %s1 = inlined_call_operand.vmem [shape: f32[40,128], index: 1, kind: input, shape index: {}]
  %s2 = inlined_call_operand.vmem [shape: f32[1,128], index: 2, kind: input, shape index: {}]
  %s3 = inlined_call_operand.vmem [shape: f32[64,32], index: 3, kind: input, shape index: {}]
  %s4 = inlined_call_operand.vmem [shape: f32[128,64], index: 4, kind: input, shape index: {}]
  %s5 = inlined_call_operand.vmem [shape: f32[128,1], index: 5, kind: input, shape index: {}]
  %s6 = inlined_call_operand.vmem [shape: f32[1,128], index: 6, kind: input, shape index: {}]
  %s7 = inlined_call_operand.<no memory space> [shape: f32[1,1], index: 7, kind: input, shape index: {}]
  %s8 = inlined_call_operand.vmem [shape: f32[8,1], index: 8, kind: output, shape index: {}]
  %s9 = sld [smem:[#allocation0]]
  $region42: #{iqn_forward.1} parent=0
    _
  %s11 = ssub.s32 1, %s9
  %s12 = scalar_select 0, %s11, %s9
  %13 = sst [smem:[#allocation2]] %s7
  // Predicated region
  $region2: #{iqn_forward.1} parent=0 // pred_check
    _
  $region3: #{iqn_forward.1} parent=0 // pred_check_branch
    %15 = sbr.rel (0) target = $region5
  $region4: #{iqn_forward.1} parent=0 // pred_region
    _
  $region5: #{iqn_forward.1} parent=0 // pred_fallthru
    _
  // Predicated region
  $region6: #{iqn_forward.1} parent=0 // pred_check
    _
  $region7: #{iqn_forward.1} parent=0 // pred_check_branch
    %17 = sbr.rel (0) target = $region9
  $region8: #{iqn_forward.1} parent=0 // pred_region
    _
  $region9: #{iqn_forward.1} parent=0 // pred_fallthru
    _
  // Predicated region
  $region10: #{iqn_forward.1} parent=0 // pred_check
    _
  $region11: #{iqn_forward.1} parent=0 // pred_check_branch
    %19 = sbr.rel (0) target = $region13
  $region12: #{iqn_forward.1} parent=0 // pred_region
    _
  $region13: #{iqn_forward.1} parent=0 // pred_fallthru
    _
  // Predicated region
  $region14: #{iqn_forward.1} parent=0 // pred_check
    _
  $region15: #{iqn_forward.1} parent=0 // pred_check_branch
    %21 = sbr.rel (0) target = $region17
  $region16: #{iqn_forward.1} parent=0 // pred_region
    _
  $region17: #{iqn_forward.1} parent=0 // pred_fallthru
    _
  // Predicated region
  $region18: #{iqn_forward.1} parent=0 // pred_check
    _
  $region19: #{iqn_forward.1} parent=0 // pred_check_branch
    %23 = sbr.rel (0) target = $region21
  $region20: #{iqn_forward.1} parent=0 // pred_region
    _
  $region21: #{iqn_forward.1} parent=0 // pred_fallthru
    _
  // Predicated region
  $region22: #{iqn_forward.1} parent=0 // pred_check
    _
  $region23: #{iqn_forward.1} parent=0 // pred_check_branch
    %25 = sbr.rel (0) target = $region25
  $region24: #{iqn_forward.1} parent=0 // pred_region
    _
  $region25: #{iqn_forward.1} parent=0 // pred_fallthru
    _
  // Predicated region
  $region26: #{iqn_forward.1} parent=0 // pred_check
    _
  $region27: #{iqn_forward.1} parent=0 // pred_check_branch
    %27 = sbr.rel (0) target = $region29
  $region28: #{iqn_forward.1} parent=0 // pred_region
    _
  $region29: #{iqn_forward.1} parent=0 // pred_fallthru
    _
  // Predicated region
  $region30: #{iqn_forward.1} parent=0 // pred_check
    _
  $region31: #{iqn_forward.1} parent=0 // pred_check_branch
    %29 = sbr.rel (0) target = $region33
  $region32: #{iqn_forward.1} parent=0 // pred_region
    _
  $region33: #{iqn_forward.1} parent=0 // pred_fallthru
    _
  %v30 = vld [vmem:[%s0] sm:$0xff]
  %v31 = vld [vmem:[%s1] sm:$0xff]
  %v32 = vld [vmem:[%s1 + $0x8] sm:$0xff]
  %v33 = vld [vmem:[%s1 + $0x10] sm:$0xff]
  %v34 = vld [vmem:[%s1 + $0x18] sm:$0xff]
  %v35 = vld [vmem:[%s1 + $0x20] sm:$0xff]
  %v36 = vld [vmem:[%s2] sm:$0x1]
  %v38 = vperm.slane %v36, 0
  %vm40 = vcmask 326656
  %v42 = vsel %vm40, %v30, 0
  %44 = vmatpush.msra.mxu0 0.0
  %45 = vmatpush.msra.mxu0 0.0
  %46 = vmatpush.msra.mxu0 0.0
  %47 = vmatpush.msra.mxu0 0.0
  %48 = vmatpush.msra.mxu0 0.0
  %49 = vmatpush.msra.mxu0 0.0
  %50 = vmatpush.msra.mxu0 0.0
  %51 = vmatpush.msra.mxu0 0.0
  %52 = vmatpush.msra.mxu0 0.0
  %53 = vmatpush.msra.mxu0 0.0
  %54 = vmatpush.msra.mxu0 0.0
  %55 = vmatpush.msra.mxu0 %v35
  %56 = vmatpush.msra.mxu0 %v34
  %57 = vmatpush.msra.mxu0 %v33
  %58 = vmatpush.msra.mxu0 %v32
  %59 = vmatpush.msra.mxu0 %v31
  %60 = vmatmul.f32.gmra.mxu0 %v42
  %v61 = vpop.f32.mrf.mxu0
  %v62 = vadd.f32 %v38, %v61
  %63 = vdwg.mxu0
  %v64 = vmax.f32 %v62, 0.0
  %v65 = vld [vmem:[%s4] sm:$0xff]
  %v66 = vld [vmem:[%s4 + $0x8] sm:$0xff]
  %v67 = vld [vmem:[%s4 + $0x10] sm:$0xff]
  %v68 = vld [vmem:[%s4 + $0x18] sm:$0xff]
  %v69 = vld [vmem:[%s4 + $0x20] sm:$0xff]
  %v70 = vld [vmem:[%s4 + $0x28] sm:$0xff]
  %v71 = vld [vmem:[%s4 + $0x30] sm:$0xff]
  %v72 = vld [vmem:[%s4 + $0x38] sm:$0xff]
  %v73 = vld [vmem:[%s4 + $0x40] sm:$0xff]
  %v74 = vld [vmem:[%s4 + $0x48] sm:$0xff]
  %v75 = vld [vmem:[%s4 + $0x50] sm:$0xff]
  %v76 = vld [vmem:[%s4 + $0x58] sm:$0xff]
  %v77 = vld [vmem:[%s4 + $0x60] sm:$0xff]
  %v78 = vld [vmem:[%s4 + $0x68] sm:$0xff]
  %v79 = vld [vmem:[%s4 + $0x70] sm:$0xff]
  %v80 = vld [vmem:[%s4 + $0x78] sm:$0xff]
  %v81 = vld [vmem:[%s3] sm:$0xff]
  %v82 = vld [vmem:[%s3 + $0x8] sm:$0xff]
  %v83 = vld [vmem:[%s3 + $0x10] sm:$0xff]
  %v84 = vld [vmem:[%s3 + $0x18] sm:$0xff]
  %v85 = vld [vmem:[%s3 + $0x20] sm:$0xff]
  %v86 = vld [vmem:[%s3 + $0x28] sm:$0xff]
  %v87 = vld [vmem:[%s3 + $0x30] sm:$0xff]
  %v88 = vld [vmem:[%s3 + $0x38] sm:$0xff]
  %v89 = vld [vmem:[%s5] sm:$0xff]
  %v90 = vld [vmem:[%s5 + $0x8] sm:$0xff]
  %v91 = vld [vmem:[%s5 + $0x10] sm:$0xff]
  %v92 = vld [vmem:[%s5 + $0x18] sm:$0xff]
  %v93 = vld [vmem:[%s5 + $0x20] sm:$0xff]
  %v94 = vld [vmem:[%s5 + $0x28] sm:$0xff]
  %v95 = vld [vmem:[%s5 + $0x30] sm:$0xff]
  %v96 = vld [vmem:[%s5 + $0x38] sm:$0xff]
  %v97 = vld [vmem:[%s5 + $0x40] sm:$0xff]
  %v98 = vld [vmem:[%s5 + $0x48] sm:$0xff]
  %v99 = vld [vmem:[%s5 + $0x50] sm:$0xff]
  %v100 = vld [vmem:[%s5 + $0x58] sm:$0xff]
  %v101 = vld [vmem:[%s5 + $0x60] sm:$0xff]
  %v102 = vld [vmem:[%s5 + $0x68] sm:$0xff]
  %v103 = vld [vmem:[%s5 + $0x70] sm:$0xff]
  %v104 = vld [vmem:[%s5 + $0x78] sm:$0xff]
  %106 = vset.pattern.permute.xlu0 0
  %107 = vperm.xlu0 %106, %v89
  %v108 = vpop.permute.xlu0 %107
  %111 = vset.pattern.permute.xlu0 0
  %112 = vperm.xlu0 %111, %v90
  %v113 = vpop.permute.xlu0 %112
  %116 = vset.pattern.permute.xlu0 0
  %117 = vperm.xlu0 %116, %v91
  %v118 = vpop.permute.xlu0 %117
  %121 = vset.pattern.permute.xlu0 0
  %122 = vperm.xlu0 %121, %v92
  %v123 = vpop.permute.xlu0 %122
  %126 = vset.pattern.permute.xlu0 0
  %127 = vperm.xlu0 %126, %v93
  %v128 = vpop.permute.xlu0 %127
  %131 = vset.pattern.permute.xlu0 0
  %132 = vperm.xlu0 %131, %v94
  %v133 = vpop.permute.xlu0 %132
  %136 = vset.pattern.permute.xlu0 0
  %137 = vperm.xlu0 %136, %v95
  %v138 = vpop.permute.xlu0 %137
  %141 = vset.pattern.permute.xlu0 0
  %142 = vperm.xlu0 %141, %v96
  %v143 = vpop.permute.xlu0 %142
  %146 = vset.pattern.permute.xlu0 0
  %147 = vperm.xlu0 %146, %v97
  %v148 = vpop.permute.xlu0 %147
  %151 = vset.pattern.permute.xlu0 0
  %152 = vperm.xlu0 %151, %v98
  %v153 = vpop.permute.xlu0 %152
  %156 = vset.pattern.permute.xlu0 0
  %157 = vperm.xlu0 %156, %v99
  %v158 = vpop.permute.xlu0 %157
  %161 = vset.pattern.permute.xlu0 0
  %162 = vperm.xlu0 %161, %v100
  %v163 = vpop.permute.xlu0 %162
  %166 = vset.pattern.permute.xlu0 0
  %167 = vperm.xlu0 %166, %v101
  %v168 = vpop.permute.xlu0 %167
  %171 = vset.pattern.permute.xlu0 0
  %172 = vperm.xlu0 %171, %v102
  %v173 = vpop.permute.xlu0 %172
  %176 = vset.pattern.permute.xlu0 0
  %177 = vperm.xlu0 %176, %v103
  %v178 = vpop.permute.xlu0 %177
  %181 = vset.pattern.permute.xlu0 0
  %182 = vperm.xlu0 %181, %v104
  %v183 = vpop.permute.xlu0 %182
  %vm185 = vcmask 523264
  %v187 = vsel %vm185, %v65, 0
  %v190 = vsel %vm185, %v66, 0
  %v193 = vsel %vm185, %v67, 0
  %v196 = vsel %vm185, %v68, 0
  %v199 = vsel %vm185, %v69, 0
  %v202 = vsel %vm185, %v70, 0
  %v205 = vsel %vm185, %v71, 0
  %v208 = vsel %vm185, %v72, 0
  %v211 = vsel %vm185, %v73, 0
  %v214 = vsel %vm185, %v74, 0
  %v217 = vsel %vm185, %v75, 0
  %v220 = vsel %vm185, %v76, 0
  %v223 = vsel %vm185, %v77, 0
  %v226 = vsel %vm185, %v78, 0
  %v229 = vsel %vm185, %v79, 0
  %v232 = vsel %vm185, %v80, 0
  %234 = vmatpush.msra.mxu0 0.0
  %235 = vmatpush.msra.mxu0 0.0
  %236 = vmatpush.msra.mxu0 0.0
  %237 = vmatpush.msra.mxu0 0.0
  %238 = vmatpush.msra.mxu0 0.0
  %239 = vmatpush.msra.mxu0 0.0
  %240 = vmatpush.msra.mxu0 0.0
  %241 = vmatpush.msra.mxu0 0.0
  %242 = vmatpush.msra.mxu0 %v88
  %243 = vmatpush.msra.mxu0 %v87
  %244 = vmatpush.msra.mxu0 %v86
  %245 = vmatpush.msra.mxu0 %v85
  %246 = vmatpush.msra.mxu0 %v84
  %247 = vmatpush.msra.mxu0 %v83
  %248 = vmatpush.msra.mxu0 %v82
  %249 = vmatpush.msra.mxu0 %v81
  %250 = vmatmul.f32.gmra.mxu0 %v187
  %v251 = vpop.f32.mrf.mxu0
  %v252 = vadd.f32 %v108, %v251
  %253 = vmatmul.f32.gmra.mxu0 %v190
  %v254 = vpop.f32.mrf.mxu0
  %v255 = vadd.f32 %v113, %v254
  %256 = vmatmul.f32.gmra.mxu0 %v193
  %v257 = vpop.f32.mrf.mxu0
  %v258 = vadd.f32 %v118, %v257
  %259 = vmatmul.f32.gmra.mxu0 %v196
  %v260 = vpop.f32.mrf.mxu0
  %v261 = vadd.f32 %v123, %v260
  %262 = vmatmul.f32.gmra.mxu0 %v199
  %v263 = vpop.f32.mrf.mxu0
  %v264 = vadd.f32 %v128, %v263
  %265 = vmatmul.f32.gmra.mxu0 %v202
  %v266 = vpop.f32.mrf.mxu0
  %v267 = vadd.f32 %v133, %v266
  %268 = vmatmul.f32.gmra.mxu0 %v205
  %v269 = vpop.f32.mrf.mxu0
  %v270 = vadd.f32 %v138, %v269
  %271 = vmatmul.f32.gmra.mxu0 %v208
  %v272 = vpop.f32.mrf.mxu0
  %v273 = vadd.f32 %v143, %v272
  %274 = vmatmul.f32.gmra.mxu0 %v211
  %v275 = vpop.f32.mrf.mxu0
  %v276 = vadd.f32 %v148, %v275
  %277 = vmatmul.f32.gmra.mxu0 %v214
  %v278 = vpop.f32.mrf.mxu0
  %v279 = vadd.f32 %v153, %v278
  %280 = vmatmul.f32.gmra.mxu0 %v217
  %v281 = vpop.f32.mrf.mxu0
  %v282 = vadd.f32 %v158, %v281
  %283 = vmatmul.f32.gmra.mxu0 %v220
  %v284 = vpop.f32.mrf.mxu0
  %v285 = vadd.f32 %v163, %v284
  %286 = vmatmul.f32.gmra.mxu0 %v223
  %v287 = vpop.f32.mrf.mxu0
  %v288 = vadd.f32 %v168, %v287
  %289 = vmatmul.f32.gmra.mxu0 %v226
  %v290 = vpop.f32.mrf.mxu0
  %v291 = vadd.f32 %v173, %v290
  %292 = vmatmul.f32.gmra.mxu0 %v229
  %v293 = vpop.f32.mrf.mxu0
  %v294 = vadd.f32 %v178, %v293
  %295 = vmatmul.f32.gmra.mxu0 %v232
  %v296 = vpop.f32.mrf.mxu0
  %v297 = vadd.f32 %v183, %v296
  %298 = vdwg.mxu0
  %v299 = vmax.f32 %v252, 0.0
  %v300 = vmax.f32 %v255, 0.0
  %v301 = vmax.f32 %v258, 0.0
  %v302 = vmax.f32 %v261, 0.0
  %v303 = vmax.f32 %v264, 0.0
  %v304 = vmax.f32 %v267, 0.0
  %v305 = vmax.f32 %v270, 0.0
  %v306 = vmax.f32 %v273, 0.0
  %v307 = vmax.f32 %v276, 0.0
  %v308 = vmax.f32 %v279, 0.0
  %v309 = vmax.f32 %v282, 0.0
  %v310 = vmax.f32 %v285, 0.0
  %v311 = vmax.f32 %v288, 0.0
  %v312 = vmax.f32 %v291, 0.0
  %v313 = vmax.f32 %v294, 0.0
  %v314 = vmax.f32 %v297, 0.0
  %v315 = vld [vmem:[%s6] sm:$0x1]
  %v317 = vperm.slane %v315, 0
  %v319 = vmul.f32 %v64, %v317
  %320 = vmatpush.msra.mxu0 %v314
  %321 = vmatpush.msra.mxu0 %v313
  %322 = vmatpush.msra.mxu0 %v312
  %323 = vmatpush.msra.mxu0 %v311
  %324 = vmatpush.msra.mxu0 %v310
  %325 = vmatpush.msra.mxu0 %v309
  %326 = vmatpush.msra.mxu0 %v308
  %327 = vmatpush.msra.mxu0 %v307
  %328 = vmatpush.msra.mxu0 %v306
  %329 = vmatpush.msra.mxu0 %v305
  %330 = vmatpush.msra.mxu0 %v304
  %331 = vmatpush.msra.mxu0 %v303
  %332 = vmatpush.msra.mxu0 %v302
  %333 = vmatpush.msra.mxu0 %v301
  %334 = vmatpush.msra.mxu0 %v300
  %335 = vmatpush.msra.mxu0 %v299
  %336 = vmatmul.f32.gmra.mxu0 %v319
  %v337 = vpop.f32.mrf.mxu0
  %v338 = vadd.f32 0.0, %v337
  %339 = vdwg.mxu0
  %vm340 = vcmask 261120
  %v341 = vsel %vm340, %v338, 0.0
  %342 = vadd.xlane.f32.xlu0 %v341
  %v343 = vpop.xlane.xlu0 %342
  %v344 = vrcp.pop 32.0
  %v345 = vmul.f32 32.0, %v344
  %v346 = vsub.f32 1.0, %v345
  %v347 = vmul.f32 %v344, %v346
  %v348 = vadd.f32 %v344, %v347
  %vm349 = vweird.f32 %v344
  %v350 = vsel %vm349, %v344, %v348
  %v351 = vmul.f32 %v343, %v350
  %s352 = sld [smem:[#allocation2]]
  %v353 = vstv %s352
  %v354 = vadd.f32 %v351, %v353
  %vm355 = vcmask 7168
  %356 = vst.msk [vmem:[%s8] sm:$0xff] %vm355, %v354
  // Predicated region
  $region34: #{iqn_forward.1} parent=0 // pred_check
    _
  $region35: #{iqn_forward.1} parent=0 // pred_check_branch
    %358 = sbr.rel (0) target = $region37
  $region36: #{iqn_forward.1} parent=0 // pred_region
    _
  $region37: #{iqn_forward.1} parent=0 // pred_fallthru
    _
  // Predicated region
  $region38: #{iqn_forward.1} parent=0 // pred_check
    _
  $region39: #{iqn_forward.1} parent=0 // pred_check_branch
    %360 = sbr.rel (0) target = $region41
  $region40: #{iqn_forward.1} parent=0 // pred_region
    _
  $region41: #{iqn_forward.1} parent=0 // pred_fallthru
    _

</llo_original>
